<compile_context>
chip_gen: v6e
topology: v6e:2x2x1
jax: 0.10.0
libtpu: 0.0.40
codegen_flags: <defaults>
</compile_context>

<pallas_src>
import functools

import jax
import jax.numpy as jnp
import numpy as np
from jax.experimental import pallas as pl
from jax.experimental.pallas import tpu as pltpu


def _mask_kernel(x_ref, s_ref, o_ref):
    # x_ref: (tr, H*W) lane-dense block; s_ref: (tr, 1) per-row scale.
    o_ref[...] = x_ref[...] * s_ref[...]


@functools.partial(jax.jit, static_argnames=("planes",))
def mask_forward(x_nchw, weight, planes=None):
    """Pallas implementation of Mask.forward.

    x_nchw: (N, C, H, W) float32
    weight: (C,) if planes is not None else (1,)
    """
    N, C, H, W = x_nchw.shape
    NC, HW = N * C, H * W

    x2d = x_nchw.reshape(NC, HW).astype(jnp.float32)
    w = weight.astype(jnp.float32)

    if planes is not None:
        # weight[None, :, None, None]: per-channel scale -> one scalar per row
        # of the (N*C, H*W) view (row n*C + c gets weight[c]).
        scale = jnp.broadcast_to(w.reshape(1, C), (N, C)).reshape(NC, 1)
    else:
        # Scalar weight (shape (1,)) multiplies every element.
        scale = jnp.broadcast_to(w.reshape(1, 1), (NC, 1))

    # Row-block size: a multiple of 8 sublanes, grown while it divides N*C and
    # stays modest so per-block VMEM is bounded at large sizes.  Falls back to
    # the full row extent when N*C is not 8-aligned (a block dim equal to the
    # array dim is always legal).
    if NC % 8 == 0:
        tr = 8
        while tr < min(NC, 256) and NC % (tr * 2) == 0:
            tr *= 2
    else:
        tr = NC

    out2d = pl.pallas_call(
        _mask_kernel,
        out_shape=jax.ShapeDtypeStruct((NC, HW), jnp.float32),
        grid=(NC // tr,),
        in_specs=[
            pl.BlockSpec((tr, HW), lambda i: (i, 0)),
            pl.BlockSpec((tr, 1), lambda i: (i, 0)),
        ],
        out_specs=pl.BlockSpec((tr, HW), lambda i: (i, 0)),
        compiler_params=pltpu.CompilerParams(
            dimension_semantics=("parallel",)),
    )(x2d, scale)

    return out2d.reshape(N, C, H, W)


def _reference_forward(x_nchw, weight, planes=None):
    """Pure-JAX reference matching the PyTorch Mask.forward semantics."""
    if planes is not None:
        return x_nchw * weight[None, :, None, None]
    return x_nchw * weight  # (1,) broadcasts over everything


if __name__ == "__main__":
    # Small shapes consistent with the module: batch=2, channels=4, 16x16.
    N, C, H, W = 2, 4, 16, 16

    key = jax.random.PRNGKey(0)
    kx, kw = jax.random.split(key, 2)

    x = jax.random.normal(kx, (N, C, H, W), dtype=jnp.float32)

    # --- per-channel case (planes=C): one weight entry per channel ---
    w_chan = jax.random.normal(kw, (C,), dtype=jnp.float32)
    out = jax.block_until_ready(mask_forward(x, w_chan, planes=C))
    ref = jax.block_until_ready(_reference_forward(x, w_chan, planes=C))
    np.testing.assert_allclose(np.asarray(out), np.asarray(ref),
                               rtol=1e-6, atol=1e-6)

    # --- scalar case (planes=None): module default init_value=[1.0] ---
    w_scalar = jnp.array([1.0], dtype=jnp.float32)
    out_s = jax.block_until_ready(mask_forward(x, w_scalar, planes=None))
    ref_s = jax.block_until_ready(_reference_forward(x, w_scalar, planes=None))
    np.testing.assert_allclose(np.asarray(out_s), np.asarray(ref_s),
                               rtol=1e-6, atol=1e-6)

    print("KERNEL_OK")
</pallas_src>

<mosaic_0001>
module attributes {stable_mosaic.version = 11 : i64} {
  func.func @_mask_kernel(%arg0: i32, %arg1: memref<8x256xf32, #tpu.memory_space<vmem>>, %arg2: memref<8x1xf32, #tpu.memory_space<vmem>>, %arg3: memref<8x256xf32, #tpu.memory_space<vmem>>) attributes {dimension_semantics = [#tpu.dimension_semantics<parallel>], iteration_bounds = array<i64: 1>, scalar_prefetch = 0 : i64, scratch_operands = 0 : i64, tpu.core_type = #tpu.core_type<tc>, window_params = [{transform_indices = @transform_0, window_bounds = array<i64: 8, 256>}, {transform_indices = @transform_1, window_bounds = array<i64: 8, 1>}, {transform_indices = @transform_2, window_bounds = array<i64: 8, 256>}]} {
    %c0 = arith.constant 0 : index
    %c0_0 = arith.constant 0 : index
    %0 = vector.load %arg1[%c0, %c0_0] : memref<8x256xf32, #tpu.memory_space<vmem>>, vector<8x256xf32>
    %c0_1 = arith.constant 0 : index
    %c0_2 = arith.constant 0 : index
    %1 = vector.load %arg2[%c0_1, %c0_2] : memref<8x1xf32, #tpu.memory_space<vmem>>, vector<8x1xf32>
    %2 = vector.broadcast %1 : vector<8x1xf32> to vector<8x256xf32>
    %3 = arith.mulf %0, %2 : vector<8x256xf32>
    %c0_3 = arith.constant 0 : index
    %c0_4 = arith.constant 0 : index
    %4 = vector.load %arg3[%c0_3, %c0_4] : memref<8x256xf32, #tpu.memory_space<vmem>>, vector<8x256xf32>
    tpu.vector_store %arg3[%c0_3, %c0_4], %3 {strides = array<i32>} : memref<8x256xf32, #tpu.memory_space<vmem>>, vector<8x256xf32>,
    return
  }
  func.func @transform_0(%arg0: i32) -> (i32, i32) {
    %c0_i32 = arith.constant 0 : i32
    %c0_i32_0 = arith.constant 0 : i32
    return %arg0, %c0_i32 : i32, i32
  }
  func.func @transform_1(%arg0: i32) -> (i32, i32) {
    %c0_i32 = arith.constant 0 : i32
    %c0_i32_0 = arith.constant 0 : i32
    return %arg0, %c0_i32 : i32, i32
  }
  func.func @transform_2(%arg0: i32) -> (i32, i32) {
    %c0_i32 = arith.constant 0 : i32
    %c0_i32_0 = arith.constant 0 : i32
    return %arg0, %c0_i32 : i32, i32
  }
}

</mosaic_0001>

<llo_original>
// kernel: mask_forward.1
$region0: #{mask_forward.1}
  #allocation0 [shape = 'u32[]', space=smem, size = 0x4, offset = 0x4, fixed_abs, tag = 'smem constant byte address 0x4 - core index']
  #allocation1 [shape = 'u32[144,128]{1,0:T(1,128)}', space=vmem, size = 0x12000, scoped, tag = 'internal scratch']
  %s0 = inlined_call_operand.vmem [shape: f32[8,256], index: 0, kind: input, shape index: {}]
  %s1 = inlined_call_operand.vmem [shape: f32[8,1], index: 1, kind: input, shape index: {}]
  %s2 = inlined_call_operand.vmem [shape: f32[8,256], index: 2, kind: output, shape index: {}]
  %s3 = sld [smem:[#allocation0]]
  $region18: #{mask_forward.1} parent=0
    _
  %s5 = ssub.s32 1, %s3
  %s6 = scalar_select 0, %s5, %s3
  // Predicated region
  $region2: #{mask_forward.1} parent=0 // pred_check
    _
  $region3: #{mask_forward.1} parent=0 // pred_check_branch
    %8 = sbr.rel (0) target = $region5
  $region4: #{mask_forward.1} parent=0 // pred_region
    _
  $region5: #{mask_forward.1} parent=0 // pred_fallthru
    _
  // Predicated region
  $region6: #{mask_forward.1} parent=0 // pred_check
    _
  $region7: #{mask_forward.1} parent=0 // pred_check_branch
    %10 = sbr.rel (0) target = $region9
  $region8: #{mask_forward.1} parent=0 // pred_region
    _
  $region9: #{mask_forward.1} parent=0 // pred_fallthru
    _
  %v11 = vld [vmem:[%s0] sm:$0xff]
  %v12 = vld [vmem:[%s0 + $0x8] sm:$0xff]
  %v13 = vld [vmem:[%s1] sm:$0xff]
  %15 = vset.pattern.permute.xlu0 0
  %16 = vperm.xlu0 %15, %v13
  %v17 = vpop.permute.xlu0 %16
  %v19 = vmul.f32 %v11, %v17
  %v20 = vmul.f32 %v12, %v17
  %21 = vst [vmem:[%s2] sm:$0xff] %v19
  %22 = vst [vmem:[%s2 + $0x8] sm:$0xff] %v20
  // Predicated region
  $region10: #{mask_forward.1} parent=0 // pred_check
    _
  $region11: #{mask_forward.1} parent=0 // pred_check_branch
    %24 = sbr.rel (0) target = $region13
  $region12: #{mask_forward.1} parent=0 // pred_region
    _
  $region13: #{mask_forward.1} parent=0 // pred_fallthru
    _
  // Predicated region
  $region14: #{mask_forward.1} parent=0 // pred_check
    _
  $region15: #{mask_forward.1} parent=0 // pred_check_branch
    %26 = sbr.rel (0) target = $region17
  $region16: #{mask_forward.1} parent=0 // pred_region
    _
  $region17: #{mask_forward.1} parent=0 // pred_fallthru
    _

</llo_original>
